<compile_context>
chip_gen: v7x
topology: tpu7x:2x2x1
jax: 0.10.0
libtpu: 0.0.40
codegen_flags: <defaults>
</compile_context>

<pallas_src>
import functools

import jax
import jax.numpy as jnp
from jax.experimental import pallas as pl
from jax.experimental.pallas import tpu as pltpu

MASK_START = 10                    # indices >= 10 along the original last axis are zeroed
_LANES = 128                       # TPU vreg lane width
_SMALL_SIZE_THRESHOLD = 1 << 18    # ~1 MiB f32: below this the fused XLA update wins
_VMEM_LIMIT_BYTES = 32 << 20       # explicit scoped-VMEM budget (safe on v5e/v6e/v7x)

# Per-generation target block size (bytes). Bigger blocks amortize the ~0.35 us
# per-grid-step overhead; sized so in+out double-buffering stays well under VMEM.
_BLOCK_BYTES = {
    "v5e": 2 << 20,
    "v6e": 4 << 20,
    "v7x": 4 << 20,
    "unknown": 2 << 20,
}


def _device_info():
    """Best-effort (generation, num_tensorcores) from the attached device."""
    kind = ""
    try:
        kind = jax.devices()[0].device_kind.lower()
    except Exception:  # no device / odd backend -> conservative defaults
        pass
    if "v7" in kind or "7x" in kind:
        return "v7x", 2
    if "v6" in kind:
        return "v6e", 1
    if "v5 lite" in kind or "v5e" in kind or "v5lite" in kind:
        return "v5e", 1
    return "unknown", 1


def _adjust_for_even_grid(rows, tile_rows, granule, num_cores):
    """Shrink tile_rows (keeping sublane granule) so grid length divides num_cores."""
    if num_cores < 2 or rows <= tile_rows:
        return tile_rows
    n_blocks = pl.cdiv(rows, tile_rows)
    if n_blocks % num_cores == 0:
        return tile_rows
    target_blocks = ((n_blocks + num_cores - 1) // num_cores) * num_cores
    new_tile = pl.cdiv(rows, target_blocks)
    new_tile = max(granule, ((new_tile + granule - 1) // granule) * granule)
    if pl.cdiv(rows, new_tile) % num_cores == 0:
        return new_tile
    return tile_rows                # granule rounding defeated the adjustment; keep original


def _mask_kernel(x_ref, o_ref, *, period, mask_start):
    # Original last-dim index of a lane is (lane % period): lanes % period == 0 in the
    # lane-dense layout, and period == lanes in the fallback layout, so one formula
    # covers both. Built as (1, lanes) and broadcast by jnp.where over the tile rows.
    lanes = x_ref.shape[-1]
    lane = jax.lax.broadcasted_iota(jnp.int32, (1, lanes), dimension=1)
    keep = (lane % period) < mask_start
    o_ref[...] = jnp.where(keep, x_ref[...], 0).astype(o_ref.dtype)


def mask_out_target(x, *, mask_start=MASK_START,
                    size_threshold=_SMALL_SIZE_THRESHOLD, alias_input=True):
    """Equivalent of MaskOutTarget.forward: x[..., mask_start:] = 0; return x."""
    d = x.shape[-1]
    if d <= mask_start:            # nothing to zero
        return x
    if x.size < size_threshold:    # size-gated fallback: fused XLA op, no kernel launch
        return x.at[..., mask_start:].set(0)

    orig_shape = x.shape
    total = x.size
    itemsize = jnp.dtype(x.dtype).itemsize
    granule = max(8, 32 // itemsize)   # packed-dtype sublane granule: f32 8, bf16 16, i8 32

    # Lane-dense layout when the last dim packs evenly into 128 lanes.
    if d <= _LANES and _LANES % d == 0 and total % _LANES == 0:
        lanes = _LANES
    else:
        lanes = d                  # fallback: keep D as the full (untiled) last block dim
    period = d
    rows = total // lanes
    x2 = x.reshape(rows, lanes)    # free reshape (contiguous), lane-dense view

    gen, num_cores = _device_info()
    block_bytes = _BLOCK_BYTES.get(gen, _BLOCK_BYTES["unknown"])

    tile_rows = max(granule, block_bytes // (lanes * itemsize))
    if rows <= tile_rows:
        tile_rows = rows                                        # full extent -> layout-legal
    else:
        tile_rows = max(granule, (tile_rows // granule) * granule)
        tile_rows = _adjust_for_even_grid(rows, tile_rows, granule, num_cores)
    grid = (pl.cdiv(rows, tile_rows),)

    kernel = functools.partial(_mask_kernel, period=period, mask_start=mask_start)
    out2 = pl.pallas_call(
        kernel,
        out_shape=jax.ShapeDtypeStruct(x2.shape, x2.dtype),
        grid=grid,
        in_specs=[pl.BlockSpec((tile_rows, lanes), lambda i: (i, 0))],
        out_specs=pl.BlockSpec((tile_rows, lanes), lambda i: (i, 0)),
        # In-place PyTorch semantics; only a true alias when x is jit-donated.
        input_output_aliases={0: 0} if alias_input else {},
        compiler_params=pltpu.CompilerParams(
            dimension_semantics=("parallel",),
            vmem_limit_bytes=_VMEM_LIMIT_BYTES),
        cost_estimate=pl.CostEstimate(
            flops=0, transcendentals=0, bytes_accessed=2 * total * itemsize),
    )(x2)
    return out2.reshape(orig_shape)


if __name__ == "__main__":
    key = jax.random.PRNGKey(0)
    k1, k2 = jax.random.split(key)

    # Case 1: lane-dense path (d=16 divides 128, total a multiple of 128).
    x1 = jax.random.normal(k1, (2, 8, 16), dtype=jnp.float32)
    expected1 = x1.at[..., MASK_START:].set(0.0)     # reference computed before the call
    out1 = jax.block_until_ready(mask_out_target(x1, size_threshold=0))
    assert out1.shape == expected1.shape and out1.dtype == expected1.dtype
    assert jnp.allclose(out1, expected1), "mismatch vs reference (lane-dense path)"
    assert jnp.all(out1[..., MASK_START:] == 0.0)
    assert jnp.allclose(out1[..., :MASK_START], x1[..., :MASK_START])

    # Case 2: fallback layout path (total not a multiple of 128, odd row count).
    x2 = jax.random.normal(k2, (3, 7, 16), dtype=jnp.float32)
    expected2 = x2.at[..., MASK_START:].set(0.0)
    out2 = jax.block_until_ready(mask_out_target(x2, size_threshold=0))
    assert jnp.allclose(out2, expected2), "mismatch vs reference (fallback path)"

    print("KERNEL_OK")
</pallas_src>

<mosaic_0001>
module attributes {stable_mosaic.version = 11 : i64} {
  func.func @_mask_kernel(%arg0: i32, %arg1: memref<2x128xf32, #tpu.memory_space<vmem>>, %arg2: memref<2x128xf32, #tpu.memory_space<vmem>>) attributes {dimension_semantics = [#tpu.dimension_semantics<parallel>], iteration_bounds = array<i64: 1>, scalar_prefetch = 0 : i64, scratch_operands = 0 : i64, tpu.core_type = #tpu.core_type<tc>, window_params = [{transform_indices = @transform_0, window_bounds = array<i64: 2, 128>}, {transform_indices = @transform_1, window_bounds = array<i64: 2, 128>}]} {
    %0 = tpu.iota {dimensions = array<i32: 1>} : vector<1x128xi32>
    %c16_i32 = arith.constant 16 : i32
    %c0_i32 = arith.constant 0 : i32
    %1 = arith.cmpi eq, %c16_i32, %c0_i32 : i32
    %c1_i32 = arith.constant 1 : i32
    %2 = arith.select %1, %c1_i32, %c16_i32 : i32
    %3 = vector.broadcast %2 : i32 to vector<1x128xi32>
    %4 = arith.remsi %0, %3 : vector<1x128xi32>
    %c0_i32_0 = arith.constant 0 : i32
    %5 = vector.broadcast %c0_i32_0 : i32 to vector<1x128xi32>
    %6 = arith.cmpi ne, %4, %5 : vector<1x128xi32>
    %c0_i32_1 = arith.constant 0 : i32
    %7 = vector.broadcast %c0_i32_1 : i32 to vector<1x128xi32>
    %8 = arith.cmpi slt, %4, %7 : vector<1x128xi32>
    %c0_i32_2 = arith.constant 0 : i32
    %9 = arith.cmpi slt, %2, %c0_i32_2 : i32
    %10 = vector.broadcast %9 : i1 to vector<1x128xi1>
    %11 = vector.broadcast %10 : vector<1x128xi1> to vector<1x128xi1>
    %12 = arith.xori %8, %11 : vector<1x128xi1>
    %13 = arith.andi %12, %6 : vector<1x128xi1>
    %14 = vector.broadcast %2 : i32 to vector<1x128xi32>
    %15 = arith.addi %4, %14 : vector<1x128xi32>
    %16 = arith.select %13, %15, %4 : vector<1x128xi1>, vector<1x128xi32>
    %c10_i32 = arith.constant 10 : i32
    %17 = vector.broadcast %c10_i32 : i32 to vector<1x128xi32>
    %18 = arith.cmpi slt, %16, %17 : vector<1x128xi32>
    %c0 = arith.constant 0 : index
    %c0_3 = arith.constant 0 : index
    %19 = vector.load %arg1[%c0, %c0_3] : memref<2x128xf32, #tpu.memory_space<vmem>>, vector<2x128xf32>
    %c0_i32_4 = arith.constant 0 : i32
    %20 = arith.sitofp %c0_i32_4 : i32 to f32
    %21 = vector.shape_cast %18 : vector<1x128xi1> to vector<1x128xi1>
    %22 = vector.broadcast %21 : vector<1x128xi1> to vector<2x128xi1>
    %23 = vector.broadcast %20 : f32 to vector<2x128xf32>
    %24 = arith.select %22, %19, %23 : vector<2x128xi1>, vector<2x128xf32>
    %c0_5 = arith.constant 0 : index
    %c0_6 = arith.constant 0 : index
    %25 = vector.load %arg2[%c0_5, %c0_6] : memref<2x128xf32, #tpu.memory_space<vmem>>, vector<2x128xf32>
    tpu.vector_store %arg2[%c0_5, %c0_6], %24 {strides = array<i32>} : memref<2x128xf32, #tpu.memory_space<vmem>>, vector<2x128xf32>,
    return
  }
  func.func @transform_0(%arg0: i32) -> (i32, i32) {
    %c0_i32 = arith.constant 0 : i32
    %c0_i32_0 = arith.constant 0 : i32
    return %arg0, %c0_i32 : i32, i32
  }
  func.func @transform_1(%arg0: i32) -> (i32, i32) {
    %c0_i32 = arith.constant 0 : i32
    %c0_i32_0 = arith.constant 0 : i32
    return %arg0, %c0_i32 : i32, i32
  }
}

</mosaic_0001>

<llo_original>
// kernel: tpu_custom_call.1
$region0: #{tpu_custom_call.1}
  #allocation0 [shape = 'u32[]', space=smem, size = 0x4, offset = 0x4, fixed_abs, tag = 'smem constant byte address 0x4 - core index']
  #allocation1 [shape = 'u32[144,128]{1,0:T(1,128)}', space=vmem, size = 0x12000, scoped, tag = 'internal scratch']
  %s0 = inlined_call_operand.hbm [shape: f32[2,128], index: 0, kind: input, shape index: {}, may-alias: {0,1}]
  %s1 = inlined_call_operand.hbm [shape: f32[2,128], index: 1, kind: output, shape index: {}, may-alias: {0,1}]
  %s2 = sld [smem:[#allocation0]]
  $region18: #{tpu_custom_call.1} parent=0
    _
  %s4 = ssub.s32 1, %s2
  %s5 = scalar_select 0, %s4, %s2
  $region1: #{tpu_custom_call.1} parent=0
    #allocation2 [shape = 'u8[1024]{0}', space=vmem, size = 0x400, scoped, tag = 'input window, operand 0, single buffered']
    #allocation3 [shape = 's32[1]{0}', space=sflag, size = 0x4, scoped, tag = 'scoped memory for tpu_custom_call.1']
    #allocation4 [shape = 's32[1]{0}', space=sflag, size = 0x4, scoped, tag = 'scoped memory for tpu_custom_call.1']
    #allocation5 [shape = 'u8[1024]{0}', space=vmem, size = 0x400, scoped, tag = 'output window, operand 0, single buffered']
    %6 = vsyncpa [#allocation3], 0
    %7 = vsyncpa [#allocation4], 0
    // Predicated region
    $region2: #{tpu_custom_call.1} parent=1 // pred_check
      _
    $region3: #{tpu_custom_call.1} parent=1 // pred_check_branch
      %9 = sbr.rel (0) target = $region5
    $region4: #{tpu_custom_call.1} parent=1 // pred_region
      %s11 = ssub.s32 32, 32
      %12 = vsyncadd [#allocation3], %s11
      %s14 = sshll.u32 [#allocation2], 4
      %s15 = int_to_ptr.vmem [resolvable:$true] %s14
      %17 = dma.hbm_to_vmem [thread:$0]  %s0, 32, %s15, [#allocation3]
    $region5: #{tpu_custom_call.1} parent=1 // pred_fallthru
      _
    // Predicated region
    $region6: #{tpu_custom_call.1} parent=1 // pred_check
      _
    $region7: #{tpu_custom_call.1} parent=1 // pred_check_branch
      %19 = sbr.rel (0) target = $region9
    $region8: #{tpu_custom_call.1} parent=1 // pred_region
      %20 = dma.done [#allocation3], 32
    $region9: #{tpu_custom_call.1} parent=1 // pred_fallthru
      _
    %v21 = vlaneseq
    %v22 = vand.u32 %v21, 127
    %vm23 = vcmp.lt.s32.totalorder %v22, 0
    %v24 = vsub.s32 0, %v22
    %v25 = vsel %vm23, %v24, %v22
    %v26 = vshrl.u32 %v25, 4
    %v27 = vand.u32 %v25, 15
    %v28 = vsub.s32 0, %v27
    %v29 = vsel %vm23, %v28, %v27
    %vm30 = vcmp.ne.s32.totalorder %v29, 0
    %vm31 = vcmp.lt.s32.totalorder %v29, 0
    %vm32 = vmand %vm31, %vm30
    %v33 = vadd.s32 %v29, 16
    %v34 = vsel %vm32, %v33, %v29
    %vm35 = vcmp.lt.s32.totalorder %v34, 10
    %v36 = vld [vmem:[#allocation2] sm:$0x3]
    %v37 = vsel %vm35, 1, 0
    %vm38 = vcmp.eq.s32.totalorder %v37, 1
    %v39 = vsel %vm38, %v36, 0.0
    %40 = vst [vmem:[#allocation5] sm:$0x3] %v39
    // Predicated region
    $region10: #{tpu_custom_call.1} parent=1 // pred_check
      _
    $region11: #{tpu_custom_call.1} parent=1 // pred_check_branch
      %42 = sbr.rel (0) target = $region13
    $region12: #{tpu_custom_call.1} parent=1 // pred_region
      %s44 = ssub.s32 32, 32
      %45 = vsyncadd [#allocation4], %s44
      %s47 = sshll.u32 [#allocation5], 4
      %s48 = int_to_ptr.vmem [resolvable:$true] %s47
      %50 = dma.vmem_to_hbm [thread:$0]  %s48, 32, %s1, [#allocation4]
    $region13: #{tpu_custom_call.1} parent=1 // pred_fallthru
      _
    // Predicated region
    $region14: #{tpu_custom_call.1} parent=1 // pred_check
      _
    $region15: #{tpu_custom_call.1} parent=1 // pred_check_branch
      %52 = sbr.rel (0) target = $region17
    $region16: #{tpu_custom_call.1} parent=1 // pred_region
      %53 = dma.done [#allocation4], 32
    $region17: #{tpu_custom_call.1} parent=1 // pred_fallthru
      _
    %54 = vsyncpa [#allocation3], 1
    %55 = vsyncpa [#allocation4], 1

</llo_original>
